<compile_context>
chip_gen: v5e
topology: v5e:2x2
jax: 0.10.0
libtpu: 0.0.40
codegen_flags: <defaults>
</compile_context>

<pallas_src>
import functools
import math

import jax
import jax.numpy as jnp
from jax.experimental import pallas as pl
from jax.experimental.pallas import tpu as pltpu


def _rnn_attention_kernel(q_ref, k_ref, v_ref, *rest, scale, has_mask):
    """Fused single-query attention over one batch tile.

    q_ref: (TB, 1, D)  k_ref: (TB, T, D)  v_ref: (TB, T, Dv)
    optional m_ref: (TB, 1, T) int32 (nonzero == padding position)
    out_ref: (TB, 1, Dv)  w_ref: (TB, 1, T)
    """
    if has_mask:
        m_ref, out_ref, w_ref = rest
    else:
        out_ref, w_ref = rest

    # Fold the 1/sqrt(D) scale into the query: tb*D multiplies instead of tb*T.
    q = q_ref[...] * jnp.asarray(scale, dtype=q_ref.dtype)            # (TB, 1, D)

    # scores[b, 0, t] = <q[b]*scale, k[b, t]>  -- MXU batched matmul, f32 accumulation.
    # K stays in its native dtype (no wholesale f32 upcast of the block).
    scores = jnp.einsum("bqd,btd->bqt", q, k_ref[...],
                        preferred_element_type=jnp.float32)           # (TB, 1, T)

    if has_mask:
        # Reference fills with -1e9 BEFORE the scale multiply; the scale is already
        # folded into q, so masked positions become exactly -1e9 * scale.
        scores = jnp.where(m_ref[...] != 0, jnp.float32(-1e9 * scale), scores)

    # Numerically-stable softmax over the key/time axis.
    s_max = jnp.max(scores, axis=-1, keepdims=True)                   # (TB, 1, 1)
    e = jnp.exp(scores - s_max)                                       # EUP
    denom = jnp.sum(e, axis=-1, keepdims=True)                        # (TB, 1, 1)
    w = e * pl.reciprocal(denom, approx=True)                         # EUP reciprocal

    # output[b, 0, :] = sum_t w[b, 0, t] * v[b, t, :]  -- MXU batched matmul, f32 acc.
    out = jnp.einsum("bqt,btd->bqd", w.astype(v_ref.dtype), v_ref[...],
                     preferred_element_type=jnp.float32)              # (TB, 1, Dv)

    out_ref[...] = out.astype(out_ref.dtype)
    w_ref[...] = w.astype(w_ref.dtype)


def _vmem_capacity_bytes():
    """Per-core VMEM capacity; conservative (v7x-sized) fallback if undetectable."""
    try:
        return int(pltpu.get_tpu_info().vmem_capacity_bytes)
    except Exception:
        return 64 * 1024 * 1024


def _per_step_vmem_bytes(tb, T, D, Dv, in_itemsize, w_itemsize, has_mask):
    """Estimated live VMEM for one grid step (double-buffered blocks + temporaries)."""
    blocks = tb * (T * D + T * Dv + D) * in_itemsize           # K, V, Q tiles
    blocks += tb * (Dv * in_itemsize + T * w_itemsize)         # out, weights tiles
    if has_mask:
        blocks += tb * T * 4                                   # int32 mask tile
    total = 2 * blocks                                         # double buffering
    total += tb * (3 * T + Dv) * 4                             # f32 scores/exp/w + out acc
    return total


def _pick_batch_tile(B, bytes_for_tb, budget):
    """Largest batch tile that divides B and fits the VMEM budget."""
    cands = sorted({d for d in range(1, min(B, 1024) + 1) if B % d == 0} | {B})
    fitting = [tb for tb in cands if bytes_for_tb(tb) <= budget]
    if not fitting:
        # Even the smallest tile exceeds the budget; use it and rely on the raised limit.
        # TODO(synk): add a flash-style (online-softmax) T-tiled variant for sequences so
        # long that a single batch row's K/V does not fit in VMEM.
        return min(cands)
    # Prefer >= 2 grid steps (megacore split on v7x, pipeline overlap), but never
    # shrink the tile below 8 just to get them.
    multi = [tb for tb in fitting if B // tb >= 2 and tb >= 8]
    return max(multi) if multi else max(fitting)


def rnn_attention(query, key, value, key_padding_mask=None):
    """Pallas port of RNNAttention.forward.

    query: (B, D); key: (B, T, D); value: (B, T, Dv)
    key_padding_mask: optional (B, T) bool, True == padding position.
    Returns (attention_output (B, Dv), attention_weight (B, T)).
    """
    B, D = query.shape
    Bk, T, Dk = key.shape
    Dv = value.shape[-1]
    assert Bk == B and Dk == D and value.shape[:2] == (B, T)
    scale = 1.0 / math.sqrt(D)          # query_dim == D
    has_mask = key_padding_mask is not None

    w_dtype = query.dtype               # torch softmax keeps the input dtype
    in_itemsize = jnp.dtype(query.dtype).itemsize
    w_itemsize = jnp.dtype(w_dtype).itemsize

    capacity = _vmem_capacity_bytes()
    budget = int(0.45 * capacity)
    bytes_for_tb = functools.partial(
        _per_step_vmem_bytes, T=T, D=D, Dv=Dv,
        in_itemsize=in_itemsize, w_itemsize=w_itemsize, has_mask=has_mask)
    tb = _pick_batch_tile(B, bytes_for_tb, budget)
    grid = (B // tb,)
    vmem_limit = min(int(0.85 * capacity), 128 * 1024 * 1024)

    # Singleton query axis (flash-attention style layout); wrapper reshapes are free.
    q3 = query.reshape(B, 1, D)

    operands = [q3, key, value]
    in_specs = [
        pl.BlockSpec((tb, 1, D), lambda b: (b, 0, 0)),          # query tile
        pl.BlockSpec((tb, T, D), lambda b: (b, 0, 0)),          # key tile
        pl.BlockSpec((tb, T, Dv), lambda b: (b, 0, 0)),         # value tile
    ]
    if has_mask:
        # The mask is a tiny fraction of HBM traffic next to K/V; int32 keeps the most
        # robust layout. The real win is skipping the mask entirely when it is absent.
        operands.append(key_padding_mask.reshape(B, 1, T).astype(jnp.int32))
        in_specs.append(pl.BlockSpec((tb, 1, T), lambda b: (b, 0, 0)))

    out3, w3 = pl.pallas_call(
        functools.partial(_rnn_attention_kernel, scale=scale, has_mask=has_mask),
        out_shape=(
            jax.ShapeDtypeStruct((B, 1, Dv), query.dtype),
            jax.ShapeDtypeStruct((B, 1, T), w_dtype),
        ),
        grid_spec=pltpu.PrefetchScalarGridSpec(
            num_scalar_prefetch=0,
            grid=grid,
            in_specs=in_specs,
            out_specs=[
                pl.BlockSpec((tb, 1, Dv), lambda b: (b, 0, 0)),  # attention output
                pl.BlockSpec((tb, 1, T), lambda b: (b, 0, 0)),   # attention weights
            ],
        ),
        # Batch tiles are independent -> megacore-parallel (2 TCs on v7x).
        compiler_params=pltpu.CompilerParams(
            dimension_semantics=("parallel",),
            vmem_limit_bytes=vmem_limit,
        ),
    )(*operands)
    return out3.reshape(B, Dv), w3.reshape(B, T)


def rnn_attention_reference(query, key, value, key_padding_mask=None):
    """Pure-JAX reference for correctness checking."""
    scale = 1.0 / math.sqrt(query.shape[-1])
    scores = jnp.einsum("bd,btd->bt", query, key)
    if key_padding_mask is not None:
        scores = jnp.where(key_padding_mask, jnp.float32(-1e9), scores)
    w = jax.nn.softmax(scores * scale, axis=-1)
    out = jnp.einsum("bt,btd->bd", w, value)
    return out, w


if __name__ == "__main__":
    B, T, D, Dv = 2, 8, 32, 32

    root = jax.random.PRNGKey(0)
    kq, kk, kv = jax.random.split(root, 3)
    query = jax.random.normal(kq, (B, D), dtype=jnp.float32)
    key_arr = jax.random.normal(kk, (B, T, D), dtype=jnp.float32)
    value = jax.random.normal(kv, (B, T, Dv), dtype=jnp.float32)
    # Padding mask: second sequence has its last 3 timesteps padded.
    key_padding_mask = jnp.zeros((B, T), dtype=bool).at[1, T - 3:].set(True)

    # Masked path.
    out, w = rnn_attention(query, key_arr, value, key_padding_mask)
    out, w = jax.block_until_ready((out, w))
    ref_out, ref_w = rnn_attention_reference(query, key_arr, value, key_padding_mask)
    assert out.shape == (B, Dv), out.shape
    assert w.shape == (B, T), w.shape
    # Tolerances account for the EUP approximate reciprocal used in the softmax norm.
    assert jnp.allclose(out, ref_out, atol=5e-3, rtol=5e-3), "output mismatch vs reference"
    assert jnp.allclose(w, ref_w, atol=5e-3, rtol=5e-3), "weights mismatch vs reference"
    assert jnp.allclose(jnp.sum(w, axis=-1), 1.0, atol=5e-3)
    assert float(jnp.max(w[1, T - 3:])) < 1e-6  # padded positions get ~0 weight

    # No-mask fast path (specialized kernel, no mask DMA at all).
    out_nm, w_nm = rnn_attention(query, key_arr, value, None)
    out_nm, w_nm = jax.block_until_ready((out_nm, w_nm))
    ref_out_nm, ref_w_nm = rnn_attention_reference(query, key_arr, value, None)
    assert jnp.allclose(out_nm, ref_out_nm, atol=5e-3, rtol=5e-3)
    assert jnp.allclose(w_nm, ref_w_nm, atol=5e-3, rtol=5e-3)

    print("KERNEL_OK")
</pallas_src>

<mosaic_0001>
module attributes {stable_mosaic.version = 11 : i64} {
  func.func @_rnn_attention_kernel(%arg0: i32, %arg1: memref<2x1x32xf32, #tpu.memory_space<vmem>>, %arg2: memref<2x8x32xf32, #tpu.memory_space<vmem>>, %arg3: memref<2x8x32xf32, #tpu.memory_space<vmem>>, %arg4: memref<2x1x8xi32, #tpu.memory_space<vmem>>, %arg5: memref<2x1x32xf32, #tpu.memory_space<vmem>>, %arg6: memref<2x1x8xf32, #tpu.memory_space<vmem>>) attributes {dimension_semantics = [#tpu.dimension_semantics<parallel>], iteration_bounds = array<i64: 1>, scalar_prefetch = 0 : i64, scratch_operands = 0 : i64, tpu.core_type = #tpu.core_type<tc>, window_params = [{transform_indices = @transform_0, window_bounds = array<i64: 2, 1, 32>}, {transform_indices = @transform_1, window_bounds = array<i64: 2, 8, 32>}, {transform_indices = @transform_2, window_bounds = array<i64: 2, 8, 32>}, {transform_indices = @transform_3, window_bounds = array<i64: 2, 1, 8>}, {transform_indices = @transform_4, window_bounds = array<i64: 2, 1, 32>}, {transform_indices = @transform_5, window_bounds = array<i64: 2, 1, 8>}]} {
    %c0 = arith.constant 0 : index
    %c0_0 = arith.constant 0 : index
    %c0_1 = arith.constant 0 : index
    %0 = vector.load %arg1[%c0, %c0_0, %c0_1] : memref<2x1x32xf32, #tpu.memory_space<vmem>>, vector<2x1x32xf32>
    %cst = arith.constant 0.176776692 : f32
    %1 = vector.broadcast %cst : f32 to vector<2x1x32xf32>
    %2 = arith.mulf %0, %1 : vector<2x1x32xf32>
    %c0_2 = arith.constant 0 : index
    %c0_3 = arith.constant 0 : index
    %c0_4 = arith.constant 0 : index
    %3 = vector.load %arg2[%c0_2, %c0_3, %c0_4] : memref<2x8x32xf32, #tpu.memory_space<vmem>>, vector<2x8x32xf32>
    "tpu.trace_start"() <{level = 10 : i32, message = "bqd,btd->bqt"}> : () -> ()
    %cst_5 = arith.constant dense<0.000000e+00> : vector<2x1x8xf32>
    %4 = tpu.matmul %2, %3, %cst_5 {dimension_numbers = #tpu.dot_dimension_numbers<[2], [2], [1], [1], [0, 0, 0, 1, 1, 1], [0], [0]>} : vector<2x1x32xf32>, vector<2x8x32xf32>, vector<2x1x8xf32> -> vector<2x1x8xf32>
    "tpu.trace_stop"() : () -> ()
    %c0_6 = arith.constant 0 : index
    %c0_7 = arith.constant 0 : index
    %c0_8 = arith.constant 0 : index
    %5 = vector.load %arg4[%c0_6, %c0_7, %c0_8] : memref<2x1x8xi32, #tpu.memory_space<vmem>>, vector<2x1x8xi32>
    %c0_i32 = arith.constant 0 : i32
    %6 = vector.broadcast %c0_i32 : i32 to vector<2x1x8xi32>
    %7 = arith.cmpi ne, %5, %6 : vector<2x1x8xi32>
    %cst_9 = arith.constant 0xCD28965F : f32
    %8 = vector.broadcast %cst_9 : f32 to vector<2x1x8xf32>
    %9 = arith.select %7, %8, %4 : vector<2x1x8xi1>, vector<2x1x8xf32>
    %cst_10 = arith.constant dense<0xFF800000> : vector<2x1xf32>
    %10 = vector.multi_reduction <maximumf>, %9, %cst_10 [2] : vector<2x1x8xf32> to vector<2x1xf32>
    %11 = vector.shape_cast %10 : vector<2x1xf32> to vector<2x1x1xf32>
    %12 = vector.broadcast %11 : vector<2x1x1xf32> to vector<2x1x8xf32>
    %13 = arith.subf %9, %12 : vector<2x1x8xf32>
    %14 = math.exp %13 : vector<2x1x8xf32>
    %cst_11 = arith.constant dense<0.000000e+00> : vector<2x1xf32>
    %15 = vector.multi_reduction <add>, %14, %cst_11 [2] : vector<2x1x8xf32> to vector<2x1xf32>
    %16 = vector.shape_cast %15 : vector<2x1xf32> to vector<2x1x1xf32>
    %17 = tpu.reciprocal %16 {approx = true} : vector<2x1x1xf32> -> vector<2x1x1xf32>
    %18 = vector.broadcast %17 : vector<2x1x1xf32> to vector<2x1x8xf32>
    %19 = arith.mulf %14, %18 : vector<2x1x8xf32>
    %c0_12 = arith.constant 0 : index
    %c0_13 = arith.constant 0 : index
    %c0_14 = arith.constant 0 : index
    %20 = vector.load %arg3[%c0_12, %c0_13, %c0_14] : memref<2x8x32xf32, #tpu.memory_space<vmem>>, vector<2x8x32xf32>
    "tpu.trace_start"() <{level = 10 : i32, message = "bqt,btd->bqd"}> : () -> ()
    %cst_15 = arith.constant dense<0.000000e+00> : vector<2x1x32xf32>
    %21 = tpu.matmul %19, %20, %cst_15 {dimension_numbers = #tpu.dot_dimension_numbers<[2], [1], [1], [2], [0, 0, 0, 1, 1, 2], [0], [0]>} : vector<2x1x8xf32>, vector<2x8x32xf32>, vector<2x1x32xf32> -> vector<2x1x32xf32>
    "tpu.trace_stop"() : () -> ()
    %c0_16 = arith.constant 0 : index
    %c0_17 = arith.constant 0 : index
    %c0_18 = arith.constant 0 : index
    %22 = vector.load %arg5[%c0_16, %c0_17, %c0_18] : memref<2x1x32xf32, #tpu.memory_space<vmem>>, vector<2x1x32xf32>
    tpu.vector_store %arg5[%c0_16, %c0_17, %c0_18], %21 {strides = array<i32>} : memref<2x1x32xf32, #tpu.memory_space<vmem>>, vector<2x1x32xf32>,
    %c0_19 = arith.constant 0 : index
    %c0_20 = arith.constant 0 : index
    %c0_21 = arith.constant 0 : index
    %23 = vector.load %arg6[%c0_19, %c0_20, %c0_21] : memref<2x1x8xf32, #tpu.memory_space<vmem>>, vector<2x1x8xf32>
    tpu.vector_store %arg6[%c0_19, %c0_20, %c0_21], %19 {strides = array<i32>} : memref<2x1x8xf32, #tpu.memory_space<vmem>>, vector<2x1x8xf32>,
    return
  }
  func.func @transform_0(%arg0: i32) -> (i32, i32, i32) {
    %c0_i32 = arith.constant 0 : i32
    %c0_i32_0 = arith.constant 0 : i32
    %c0_i32_1 = arith.constant 0 : i32
    return %arg0, %c0_i32, %c0_i32_0 : i32, i32, i32
  }
  func.func @transform_1(%arg0: i32) -> (i32, i32, i32) {
    %c0_i32 = arith.constant 0 : i32
    %c0_i32_0 = arith.constant 0 : i32
    %c0_i32_1 = arith.constant 0 : i32
    return %arg0, %c0_i32, %c0_i32_0 : i32, i32, i32
  }
  func.func @transform_2(%arg0: i32) -> (i32, i32, i32) {
    %c0_i32 = arith.constant 0 : i32
    %c0_i32_0 = arith.constant 0 : i32
    %c0_i32_1 = arith.constant 0 : i32
    return %arg0, %c0_i32, %c0_i32_0 : i32, i32, i32
  }
  func.func @transform_3(%arg0: i32) -> (i32, i32, i32) {
    %c0_i32 = arith.constant 0 : i32
    %c0_i32_0 = arith.constant 0 : i32
    %c0_i32_1 = arith.constant 0 : i32
    return %arg0, %c0_i32, %c0_i32_0 : i32, i32, i32
  }
  func.func @transform_4(%arg0: i32) -> (i32, i32, i32) {
    %c0_i32 = arith.constant 0 : i32
    %c0_i32_0 = arith.constant 0 : i32
    %c0_i32_1 = arith.constant 0 : i32
    return %arg0, %c0_i32, %c0_i32_0 : i32, i32, i32
  }
  func.func @transform_5(%arg0: i32) -> (i32, i32, i32) {
    %c0_i32 = arith.constant 0 : i32
    %c0_i32_0 = arith.constant 0 : i32
    %c0_i32_1 = arith.constant 0 : i32
    return %arg0, %c0_i32, %c0_i32_0 : i32, i32, i32
  }
}

</mosaic_0001>

<llo_original>
// kernel: tpu_custom_call.1
$region0: #{tpu_custom_call.1}
  #allocation0 [shape = 'u32[]', space=smem, size = 0x4, offset = 0x4, fixed_abs, tag = 'smem constant byte address 0x4 - core index']
  #allocation1 [shape = 'u32[72,128]{1,0:T(1,128)}', space=vmem, size = 0x9000, scoped, tag = 'internal scratch']
  %s0 = inlined_call_operand.hbm [shape: f32[2,1,32], index: 0, kind: input, shape index: {}]
  %s1 = inlined_call_operand.hbm [shape: f32[2,8,32], index: 1, kind: input, shape index: {}]
  %s2 = inlined_call_operand.hbm [shape: f32[2,8,32], index: 2, kind: input, shape index: {}]
  %s3 = inlined_call_operand.vmem [shape: s32[2,1,8], index: 3, kind: input, shape index: {}]
  %s4 = inlined_call_operand.hbm [shape: f32[2,1,32], index: 4, kind: output, shape index: {0}]
  %s5 = inlined_call_operand.hbm [shape: f32[2,1,8], index: 5, kind: output, shape index: {1}]
  %6 = xla_tuple %s4, %s5
  %s7 = sld [smem:[#allocation0]]
  $region46: #{tpu_custom_call.1} parent=0
    _
  %s9 = ssub.s32 1, %s7
  %s10 = scalar_select 0, %s9, %s7
  $region1: #{tpu_custom_call.1} parent=0
    #allocation2 [shape = 'u8[1024]{0}', space=vmem, size = 0x400, scoped, tag = 'input window, operand 0, single buffered']
    #allocation3 [shape = 's32[1]{0}', space=sflag, size = 0x4, scoped, tag = 'scoped memory for tpu_custom_call.1']
    #allocation4 [shape = 's32[1]{0}', space=sflag, size = 0x4, scoped, tag = 'scoped memory for tpu_custom_call.1']
    #allocation5 [shape = 'u8[8192]{0}', space=vmem, size = 0x2000, scoped, tag = 'input window, operand 1, single buffered']
    #allocation6 [shape = 's32[1]{0}', space=sflag, size = 0x4, scoped, tag = 'scoped memory for tpu_custom_call.1']
    #allocation7 [shape = 'u8[8192]{0}', space=vmem, size = 0x2000, scoped, tag = 'input window, operand 2, single buffered']
    #allocation8 [shape = 'u8[1024]{0}', space=vmem, size = 0x400, scoped, tag = 'output window, operand 0, single buffered']
    #allocation9 [shape = 'u8[1024]{0}', space=vmem, size = 0x400, scoped, tag = 'output window, operand 1, single buffered']
    #allocation10 [shape = 's32[1]{0}', space=sflag, size = 0x4, scoped, tag = 'scoped memory for tpu_custom_call.1']
    %11 = vsyncpa [#allocation3], 0
    %12 = vsyncpa [#allocation6], 0
    %13 = vsyncpa [#allocation4], 0
    %14 = vsyncpa [#allocation10], 0
    // Predicated region
    $region2: #{tpu_custom_call.1} parent=1 // pred_check
      _
    $region3: #{tpu_custom_call.1} parent=1 // pred_check_branch
      %16 = sbr.rel (0) target = $region5
    $region4: #{tpu_custom_call.1} parent=1 // pred_region
      %18 = vsyncadd [#allocation3], 0
      %s19 = sshll.u32 %s0, 4
      %s20 = int_to_ptr.hbm [resolvable:$true] %s19
      %s21 = sshll.u32 [#allocation2], 4
      %s22 = int_to_ptr.vmem [resolvable:$true] %s21
      %27 = dma.hbm_to_vmem [thread:$0]  %s20, 32, %s22, [#allocation3], 16, 16, 1
    $region5: #{tpu_custom_call.1} parent=1 // pred_fallthru
      _
    // Predicated region
    $region6: #{tpu_custom_call.1} parent=1 // pred_check
      _
    $region7: #{tpu_custom_call.1} parent=1 // pred_check_branch
      %29 = sbr.rel (0) target = $region9
    $region8: #{tpu_custom_call.1} parent=1 // pred_region
      %31 = vsyncadd [#allocation6], 0
      %s32 = sshll.u32 %s1, 4
      %s33 = int_to_ptr.hbm [resolvable:$true] %s32
      %s34 = sshll.u32 [#allocation5], 4
      %s35 = int_to_ptr.vmem [resolvable:$true] %s34
      %40 = dma.hbm_to_vmem [thread:$0]  %s33, 256, %s35, [#allocation6], 128, 128, 8
    $region9: #{tpu_custom_call.1} parent=1 // pred_fallthru
      _
    // Predicated region
    $region10: #{tpu_custom_call.1} parent=1 // pred_check
      _
    $region11: #{tpu_custom_call.1} parent=1 // pred_check_branch
      %42 = sbr.rel (0) target = $region13
    $region12: #{tpu_custom_call.1} parent=1 // pred_region
      %44 = vsyncadd [#allocation6], 0
      %s45 = sshll.u32 %s2, 4
      %s46 = int_to_ptr.hbm [resolvable:$true] %s45
      %s47 = sshll.u32 [#allocation7], 4
      %s48 = int_to_ptr.vmem [resolvable:$true] %s47
      %53 = dma.hbm_to_vmem [thread:$0]  %s46, 256, %s48, [#allocation6], 128, 128, 8
    $region13: #{tpu_custom_call.1} parent=1 // pred_fallthru
      _
    // Predicated region
    $region14: #{tpu_custom_call.1} parent=1 // pred_check
      _
    $region15: #{tpu_custom_call.1} parent=1 // pred_check_branch
      %55 = sbr.rel (0) target = $region17
    $region16: #{tpu_custom_call.1} parent=1 // pred_region
      _
    $region17: #{tpu_custom_call.1} parent=1 // pred_fallthru
      _
    // Predicated region
    $region18: #{tpu_custom_call.1} parent=1 // pred_check
      _
    $region19: #{tpu_custom_call.1} parent=1 // pred_check_branch
      %57 = sbr.rel (0) target = $region21
    $region20: #{tpu_custom_call.1} parent=1 // pred_region
      %59 = dma.done [#allocation3], 32
    $region21: #{tpu_custom_call.1} parent=1 // pred_fallthru
      _
    // Predicated region
    $region22: #{tpu_custom_call.1} parent=1 // pred_check
      _
    $region23: #{tpu_custom_call.1} parent=1 // pred_check_branch
      %61 = sbr.rel (0) target = $region25
    $region24: #{tpu_custom_call.1} parent=1 // pred_region
      %63 = dma.done [#allocation6], 256
    $region25: #{tpu_custom_call.1} parent=1 // pred_fallthru
      _
    // Predicated region
    $region26: #{tpu_custom_call.1} parent=1 // pred_check
      _
    $region27: #{tpu_custom_call.1} parent=1 // pred_check_branch
      %65 = sbr.rel (0) target = $region29
    $region28: #{tpu_custom_call.1} parent=1 // pred_region
      %67 = dma.done [#allocation6], 256
    $region29: #{tpu_custom_call.1} parent=1 // pred_fallthru
      _
    %v68 = vld [vmem:[#allocation2] sm:$0x1]
    %v69 = vld [vmem:[#allocation2 + $0x1] sm:$0x1]
    %v70 = vmul.f32 %v68, 0.17677669
    %v71 = vmul.f32 %v69, 0.17677669
    %v72 = vld [vmem:[#allocation5] sm:$0xff]
    %v73 = vld [vmem:[#allocation5 + $0x8] sm:$0xff]
    %vm74 = vcmask 261120
    %v76 = vsel %vm74, %v70, 0
    %v79 = vsel %vm74, %v72, 0
    %81 = vmatpush.xpose.msra.mxu0 0.0
    %82 = vmatpush.xpose.msra.mxu0 0.0
    %83 = vmatpush.xpose.msra.mxu0 0.0
    %84 = vmatpush.xpose.msra.mxu0 0.0
    %85 = vmatpush.xpose.msra.mxu0 0.0
    %86 = vmatpush.xpose.msra.mxu0 0.0
    %87 = vmatpush.xpose.msra.mxu0 0.0
    %88 = vmatpush.xpose.msra.mxu0 0.0
    %89 = vmatpush.xpose.msra.mxu0 0.0
    %90 = vmatpush.xpose.msra.mxu0 0.0
    %91 = vmatpush.xpose.msra.mxu0 0.0
    %92 = vmatpush.xpose.msra.mxu0 0.0
    %93 = vmatpush.xpose.msra.mxu0 0.0
    %94 = vmatpush.xpose.msra.mxu0 0.0
    %95 = vmatpush.xpose.msra.mxu0 0.0
    %96 = vmatpush.xpose.msra.mxu0 %v79
    %97 = vmatmul.f32.gmra.mxu0 %v76
    %v98 = vpop.f32.mrf.mxu0
    %v99 = vadd.f32 0.0, %v98
    %100 = vdwg.mxu0
    %v102 = vsel %vm74, %v71, 0
    %v105 = vsel %vm74, %v73, 0
    %107 = vmatpush.xpose.msra.mxu0 0.0
    %108 = vmatpush.xpose.msra.mxu0 0.0
    %109 = vmatpush.xpose.msra.mxu0 0.0
    %110 = vmatpush.xpose.msra.mxu0 0.0
    %111 = vmatpush.xpose.msra.mxu0 0.0
    %112 = vmatpush.xpose.msra.mxu0 0.0
    %113 = vmatpush.xpose.msra.mxu0 0.0
    %114 = vmatpush.xpose.msra.mxu0 0.0
    %115 = vmatpush.xpose.msra.mxu0 0.0
    %116 = vmatpush.xpose.msra.mxu0 0.0
    %117 = vmatpush.xpose.msra.mxu0 0.0
    %118 = vmatpush.xpose.msra.mxu0 0.0
    %119 = vmatpush.xpose.msra.mxu0 0.0
    %120 = vmatpush.xpose.msra.mxu0 0.0
    %121 = vmatpush.xpose.msra.mxu0 0.0
    %122 = vmatpush.xpose.msra.mxu0 %v105
    %123 = vmatmul.f32.gmra.mxu0 %v102
    %v124 = vpop.f32.mrf.mxu0
    %v125 = vadd.f32 0.0, %v124
    %126 = vdwg.mxu0
    %v127 = vld [vmem:[%s3] sm:$0x1]
    %v128 = vld [vmem:[%s3 + $0x1] sm:$0x1]
    %vm129 = vcmp.ne.s32.totalorder %v127, 0
    %vm130 = vcmp.ne.s32.totalorder %v128, 0
    %v131 = vsel %vm129, -1.7677669e+08, %v99
    %v132 = vsel %vm130, -1.7677669e+08, %v125
    %vm133 = vcmask 57344
    %v134 = vsel %vm133, %v131, -inf
    %135 = vmax.xlane.f32.xlu0 %v134
    %v136 = vpop.xlane.xlu0 %135
    %v137 = vsel %vm133, %v132, -inf
    %138 = vmax.xlane.f32.xlu0 %v137
    %v139 = vpop.xlane.xlu0 %138
    %v140 = vsub.f32 %v131, %v136
    %v141 = vsub.f32 %v132, %v139
    %v142 = vmul.f32 %v140, 1.442695
    %v143 = vpow.pop %v142
    %v144 = vmul.f32 %v141, 1.442695
    %v145 = vpow.pop %v144
    %v146 = vsel %vm133, %v143, 0.0
    %147 = vadd.xlane.f32.xlu0 %v146
    %v148 = vpop.xlane.xlu0 %147
    %v149 = vsel %vm133, %v145, 0.0
    %150 = vadd.xlane.f32.xlu0 %v149
    %v151 = vpop.xlane.xlu0 %150
    %v152 = vrcp.pop %v148
    %v153 = vrcp.pop %v151
    %v154 = vmul.f32 %v143, %v152
    %v155 = vmul.f32 %v145, %v153
    %v156 = vld [vmem:[#allocation7] sm:$0xff]
    %v157 = vld [vmem:[#allocation7 + $0x8] sm:$0xff]
    %vm158 = vcmask 64512
    %v160 = vsel %vm158, %v154, 0
    %162 = vmatpush.msra.mxu0 0.0
    %163 = vmatpush.msra.mxu0 0.0
    %164 = vmatpush.msra.mxu0 0.0
    %165 = vmatpush.msra.mxu0 0.0
    %166 = vmatpush.msra.mxu0 0.0
    %167 = vmatpush.msra.mxu0 0.0
    %168 = vmatpush.msra.mxu0 0.0
    %169 = vmatpush.msra.mxu0 0.0
    %170 = vmatpush.msra.mxu0 0.0
    %171 = vmatpush.msra.mxu0 0.0
    %172 = vmatpush.msra.mxu0 0.0
    %173 = vmatpush.msra.mxu0 0.0
    %174 = vmatpush.msra.mxu0 0.0
    %175 = vmatpush.msra.mxu0 0.0
    %176 = vmatpush.msra.mxu0 0.0
    %177 = vmatpush.msra.mxu0 %v156
    %178 = vmatmul.f32.gmra.mxu0 %v160
    %v179 = vpop.f32.mrf.mxu0
    %v180 = vadd.f32 0.0, %v179
    %181 = vdwg.mxu0
    %v183 = vsel %vm158, %v155, 0
    %185 = vmatpush.msra.mxu0 0.0
    %186 = vmatpush.msra.mxu0 0.0
    %187 = vmatpush.msra.mxu0 0.0
    %188 = vmatpush.msra.mxu0 0.0
    %189 = vmatpush.msra.mxu0 0.0
    %190 = vmatpush.msra.mxu0 0.0
    %191 = vmatpush.msra.mxu0 0.0
    %192 = vmatpush.msra.mxu0 0.0
    %193 = vmatpush.msra.mxu0 0.0
    %194 = vmatpush.msra.mxu0 0.0
    %195 = vmatpush.msra.mxu0 0.0
    %196 = vmatpush.msra.mxu0 0.0
    %197 = vmatpush.msra.mxu0 0.0
    %198 = vmatpush.msra.mxu0 0.0
    %199 = vmatpush.msra.mxu0 0.0
    %200 = vmatpush.msra.mxu0 %v157
    %201 = vmatmul.f32.gmra.mxu0 %v183
    %v202 = vpop.f32.mrf.mxu0
    %v203 = vadd.f32 0.0, %v202
    %204 = vdwg.mxu0
    %vm205 = vcmask 253952
    %206 = vst.msk [vmem:[#allocation8] sm:$0x1] %vm205, %v180
    %207 = vst.msk [vmem:[#allocation8 + $0x1] sm:$0x1] %vm205, %v203
    %208 = vst.msk [vmem:[#allocation9] sm:$0x1] %vm133, %v154
    %209 = vst.msk [vmem:[#allocation9 + $0x1] sm:$0x1] %vm133, %v155
    // Predicated region
    $region30: #{tpu_custom_call.1} parent=1 // pred_check
      _
    $region31: #{tpu_custom_call.1} parent=1 // pred_check_branch
      %211 = sbr.rel (0) target = $region33
    $region32: #{tpu_custom_call.1} parent=1 // pred_region
      %213 = vsyncadd [#allocation4], 0
      %s214 = sshll.u32 [#allocation8], 4
      %s215 = int_to_ptr.vmem [resolvable:$true] %s214
      %s216 = sshll.u32 %s4, 4
      %s217 = int_to_ptr.hbm [resolvable:$true] %s216
      %222 = dma.vmem_to_hbm [thread:$0]  %s215, 32, %s217, [#allocation4], 16, 16, 1
    $region33: #{tpu_custom_call.1} parent=1 // pred_fallthru
      _
    // Predicated region
    $region34: #{tpu_custom_call.1} parent=1 // pred_check
      _
    $region35: #{tpu_custom_call.1} parent=1 // pred_check_branch
      %224 = sbr.rel (0) target = $region37
    $region36: #{tpu_custom_call.1} parent=1 // pred_region
      %226 = vsyncadd [#allocation10], 0
      %s227 = sshll.u32 [#allocation9], 4
      %s228 = int_to_ptr.vmem [resolvable:$true] %s227
      %s229 = sshll.u32 %s5, 4
      %s230 = int_to_ptr.hbm [resolvable:$true] %s229
      %235 = dma.vmem_to_hbm [thread:$0]  %s228, 32, %s230, [#allocation10], 16, 16, 1
    $region37: #{tpu_custom_call.1} parent=1 // pred_fallthru
      _
    // Predicated region
    $region38: #{tpu_custom_call.1} parent=1 // pred_check
      _
    $region39: #{tpu_custom_call.1} parent=1 // pred_check_branch
      %237 = sbr.rel (0) target = $region41
    $region40: #{tpu_custom_call.1} parent=1 // pred_region
      %239 = dma.done [#allocation4], 32
    $region41: #{tpu_custom_call.1} parent=1 // pred_fallthru
      _
    // Predicated region
    $region42: #{tpu_custom_call.1} parent=1 // pred_check
      _
    $region43: #{tpu_custom_call.1} parent=1 // pred_check_branch
      %241 = sbr.rel (0) target = $region45
    $region44: #{tpu_custom_call.1} parent=1 // pred_region
      %243 = dma.done [#allocation10], 32
    $region45: #{tpu_custom_call.1} parent=1 // pred_fallthru
      _
    %244 = vsyncpa [#allocation3], 1
    %245 = vsyncpa [#allocation6], 1
    %246 = vsyncpa [#allocation4], 1
    %247 = vsyncpa [#allocation10], 1

</llo_original>
